<compile_context>
chip_gen: v6e
topology: v6e:2x2x1
jax: 0.10.0
libtpu: 0.0.40
codegen_flags: <defaults>
</compile_context>

<pallas_src>
import functools

import jax
import jax.numpy as jnp
from jax.experimental import pallas as pl
from jax.experimental.pallas import tpu as pltpu

_BN_EPS = 1e-5
_LANE = 128
_SUBLANE = 8
_VMEM_LIMIT = 32 * 1024 * 1024        # explicit scoped-VMEM limit (safe on v5e/v6e/v7x)
_VMEM_TILE_BUDGET = 12 * 1024 * 1024  # conservative per-call working-set target


def _round_up(x, m):
    return (x + m - 1) // m * m


def _make_linear_stats_kernel(dp, tile_n, n_valid, n_pad, has_num):
    """Pass 1: NaN-merge + Linear(2*dp -> dp) + per-tile BN partial statistics."""
    mask_rows = n_pad != n_valid

    def kernel(*refs):
        if has_num:
            key_ref, str_ref, num_ref, wt_ref, b_ref = refs[:5]
            x_ref, sum_ref, sq_ref, cat_ref = refs[5:]
        else:
            key_ref, str_ref, wt_ref, b_ref = refs[:4]
            x_ref, sum_ref, sq_ref, cat_ref = refs[4:]

        k = key_ref[...]
        s = str_ref[...]
        if has_num:
            num = num_ref[...]
            # masked_fill merge: keep num where it is not NaN, else keep str
            s = jnp.where(jnp.isnan(num), s, num)

        # Stage the virtual concat [key | merged] in a VMEM scratch and run ONE K=2*dp
        # matmul (keeps accumulation inside the MXU instead of two short-K dots + VPU add).
        cat_ref[:, :dp] = k
        cat_ref[:, dp:] = s
        x = jnp.dot(cat_ref[...], wt_ref[...],
                    preferred_element_type=jnp.float32) + b_ref[...]
        x_ref[...] = x                                    # f32 staging for exact BN

        if mask_rows:
            # rows beyond the true batch size must not contribute to the statistics
            row = (pl.program_id(0) * tile_n
                   + jax.lax.broadcasted_iota(jnp.int32, (tile_n, 1), 0))
            x = jnp.where(row < n_valid, x, 0.0)
        sum_ref[...] = jnp.sum(x, axis=0, keepdims=True).reshape(1, 1, dp)
        sq_ref[...] = jnp.sum(x * x, axis=0, keepdims=True).reshape(1, 1, dp)

    return kernel


def _norm_act_kernel(x_ref, scale_ref, shift_ref, a_ref, out_ref):
    """Pass 2: folded BatchNorm (y = x*scale + shift) + PReLU, cast to output dtype."""
    y = x_ref[...] * scale_ref[...] + shift_ref[...]
    out_ref[...] = jnp.where(y >= 0.0, y, a_ref[...] * y).astype(out_ref.dtype)


@functools.partial(jax.jit, static_argnames=("out_dtype", "max_rows_per_tile"))
def bottleneck_forward(key_emb, str_emb, num_emb, params, *,
                       out_dtype=None, max_rows_per_tile=1024):
    """params: 'W' (d, 2d) torch Linear layout, 'b' (d,), 'gamma' (d,), 'beta' (d,),
    'prelu_a' scalar.  Inputs are consumed in their native dtype (f32 or bf16)."""
    n, d = key_emb.shape
    in_dtype = key_emb.dtype
    out_dtype = out_dtype or in_dtype
    has_num = num_emb is not None

    dp = _round_up(d, _LANE)                      # lane-dense feature dim
    in_bytes = jnp.dtype(in_dtype).itemsize
    n_stream = 3 if has_num else 2

    # Row tile: largest multiple of 8 that keeps the double-buffered pass-1 working set
    # under budget (conservative for v7x's 64 MiB VMEM and v5e's 16 MiB scoped default).
    per_row = (n_stream * dp * in_bytes * 2       # streamed row inputs, double-buffered
               + dp * 4 * 2                       # f32 x staging output, double-buffered
               + 2 * dp * in_bytes)               # concat scratch
    fixed = 2 * dp * dp * in_bytes + 16 * dp * 4  # pinned W^T + per-feature params
    tile_cap = max(_SUBLANE, (_VMEM_TILE_BUDGET - fixed) // per_row)
    tile_n = min(int(max_rows_per_tile), tile_cap, _round_up(n, _SUBLANE))
    tile_n = max(_SUBLANE, tile_n // _SUBLANE * _SUBLANE)
    n_pad = _round_up(n, tile_n)
    n_tiles = n_pad // tile_n

    # ---- tiny host-side prep: pad to (n_pad, dp), build lane-dense padded weights -----
    def _pad_rows_cols(a):
        return jnp.pad(a, ((0, n_pad - n), (0, dp - d)))

    key_p = _pad_rows_cols(key_emb)
    str_p = _pad_rows_cols(str_emb)

    W = params["W"].astype(jnp.float32)                      # (d, 2d)
    wt = jnp.zeros((2 * dp, dp), jnp.float32)
    wt = wt.at[:d, :d].set(W[:, :d].T)                       # key half
    wt = wt.at[dp:dp + d, :d].set(W[:, d:].T)                # merged-str half
    wt = wt.astype(in_dtype)                                 # bf16 inputs -> native MXU path
    b_p = jnp.zeros((1, dp), jnp.float32).at[0, :d].set(params["b"].astype(jnp.float32))

    row_spec = pl.BlockSpec((tile_n, dp), lambda i: (i, 0))
    pinned2 = lambda i: (0, 0)                               # VMEM-resident across tiles

    in_specs = [row_spec, row_spec]
    inputs = [key_p, str_p]
    if has_num:
        in_specs.append(row_spec)
        inputs.append(_pad_rows_cols(num_emb))
    in_specs += [pl.BlockSpec((2 * dp, dp), pinned2),        # W^T pinned
                 pl.BlockSpec((1, dp), pinned2)]             # bias pinned
    inputs += [wt, b_p]

    pass1_cost = pl.CostEstimate(
        flops=2 * n_pad * (2 * dp) * dp,
        transcendentals=0,
        bytes_accessed=(n_stream * n_pad * dp * in_bytes + 2 * dp * dp * in_bytes
                        + n_pad * dp * 4 + 2 * n_tiles * dp * 4))

    x_f32, tile_sum, tile_sq = pl.pallas_call(
        _make_linear_stats_kernel(dp, tile_n, n, n_pad, has_num),
        grid_spec=pltpu.PrefetchScalarGridSpec(
            num_scalar_prefetch=0,
            grid=(n_tiles,),
            in_specs=in_specs,
            out_specs=[pl.BlockSpec((tile_n, dp), lambda i: (i, 0)),
                       pl.BlockSpec((1, 1, dp), lambda i: (i, 0, 0)),
                       pl.BlockSpec((1, 1, dp), lambda i: (i, 0, 0))],
            scratch_shapes=[pltpu.VMEM((tile_n, 2 * dp), in_dtype)]),
        out_shape=[jax.ShapeDtypeStruct((n_pad, dp), jnp.float32),
                   jax.ShapeDtypeStruct((n_tiles, 1, dp), jnp.float32),
                   jax.ShapeDtypeStruct((n_tiles, 1, dp), jnp.float32)],
        compiler_params=pltpu.CompilerParams(
            dimension_semantics=("parallel",),
            vmem_limit_bytes=_VMEM_LIMIT),
        cost_estimate=pass1_cost,
    )(*inputs)

    # ---- tiny XLA glue: combine per-tile stats, fold BN into per-feature scale/shift --
    total_sum = jnp.sum(tile_sum, axis=(0, 1))               # (dp,)
    total_sq = jnp.sum(tile_sq, axis=(0, 1))                 # (dp,)
    mean = total_sum / n
    var = jnp.maximum(total_sq / n - mean * mean, 0.0)       # biased (training-mode) var
    inv_std = jax.lax.rsqrt(var + _BN_EPS)
    gamma_p = jnp.zeros((dp,), jnp.float32).at[:d].set(params["gamma"].astype(jnp.float32))
    beta_p = jnp.zeros((dp,), jnp.float32).at[:d].set(params["beta"].astype(jnp.float32))
    scale = (gamma_p * inv_std).reshape(1, dp)
    shift = (beta_p - mean * gamma_p * inv_std).reshape(1, dp)
    a_scalar = jnp.asarray(params["prelu_a"], jnp.float32).reshape(())
    a_vec = jnp.full((1, dp), a_scalar, jnp.float32)

    out_bytes = jnp.dtype(out_dtype).itemsize
    pass2_cost = pl.CostEstimate(
        flops=3 * n_pad * dp,
        transcendentals=0,
        bytes_accessed=n_pad * dp * (4 + out_bytes) + 3 * dp * 4)

    out_p = pl.pallas_call(
        _norm_act_kernel,
        grid_spec=pltpu.PrefetchScalarGridSpec(
            num_scalar_prefetch=0,
            grid=(n_tiles,),
            in_specs=[pl.BlockSpec((tile_n, dp), lambda i: (i, 0)),
                      pl.BlockSpec((1, dp), pinned2),
                      pl.BlockSpec((1, dp), pinned2),
                      pl.BlockSpec((1, dp), pinned2)],
            out_specs=pl.BlockSpec((tile_n, dp), lambda i: (i, 0))),
        out_shape=jax.ShapeDtypeStruct((n_pad, dp), out_dtype),
        compiler_params=pltpu.CompilerParams(
            dimension_semantics=("parallel",),
            vmem_limit_bytes=_VMEM_LIMIT),
        cost_estimate=pass2_cost,
    )(x_f32, scale, shift, a_vec)

    return out_p[:n, :d]


def _reference(key_emb, str_emb, num_emb, params):
    key_emb = key_emb.astype(jnp.float32)
    str_emb = str_emb.astype(jnp.float32)
    if num_emb is not None:
        num_emb = num_emb.astype(jnp.float32)
        s = jnp.where(jnp.isnan(num_emb), str_emb, num_emb)
    else:
        s = str_emb
    x = (jnp.concatenate([key_emb, s], axis=-1) @ params["W"].astype(jnp.float32).T
         + params["b"].astype(jnp.float32))
    mean = jnp.mean(x, axis=0, keepdims=True)
    var = jnp.mean((x - mean) ** 2, axis=0, keepdims=True)
    y = (x - mean) / jnp.sqrt(var + _BN_EPS) * params["gamma"] + params["beta"]
    return jnp.where(y >= 0, y, params["prelu_a"] * y)


if __name__ == "__main__":
    root = jax.random.PRNGKey(0)
    n, d_model = 13, 32                     # odd batch -> exercises row padding + masking
    k1, k2, k3, k4, k5, k6 = jax.random.split(root, 6)

    key_emb = jax.random.normal(k1, (n, d_model), jnp.float32)
    str_emb = jax.random.normal(k2, (n, d_model), jnp.float32)
    num_vals = jax.random.normal(k3, (n, d_model), jnp.float32)
    nan_pattern = jax.random.bernoulli(k4, 0.5, (n, d_model))
    num_emb = jnp.where(nan_pattern, jnp.nan, num_vals)     # ~half NaN (categorical slots)

    bound = 1.0 / float(jnp.sqrt(2.0 * d_model))
    params = {
        "W": jax.random.uniform(k5, (d_model, 2 * d_model), jnp.float32, -bound, bound),
        "b": jax.random.uniform(k6, (d_model,), jnp.float32, -bound, bound),
        "gamma": jnp.ones((d_model,), jnp.float32),
        "beta": jnp.zeros((d_model,), jnp.float32),
        "prelu_a": jnp.float32(0.25),
    }

    # f32 path with a multi-tile grid (max_rows_per_tile=8 -> 2 row tiles, masked padding)
    out = bottleneck_forward(key_emb, str_emb, num_emb, params, max_rows_per_tile=8)
    out = jax.block_until_ready(out)
    ref = _reference(key_emb, str_emb, num_emb, params)
    assert out.shape == (n, d_model) and out.dtype == jnp.float32
    assert jnp.allclose(out, ref, atol=1e-4, rtol=1e-4), "f32 mismatch vs reference"

    # num_emb=None path (kernel variant without the num input -> no all-NaN dummy array)
    out_none = bottleneck_forward(key_emb, str_emb, None, params, max_rows_per_tile=8)
    out_none = jax.block_until_ready(out_none)
    ref_none = _reference(key_emb, str_emb, None, params)
    assert jnp.allclose(out_none, ref_none, atol=1e-4, rtol=1e-4), "num=None mismatch"

    # bf16 path: native low-precision inputs feed the MXU directly, bf16 output writeback.
    kb = key_emb.astype(jnp.bfloat16)
    sb = str_emb.astype(jnp.bfloat16)
    nb = num_emb.astype(jnp.bfloat16)
    params_bf = dict(params, W=params["W"].astype(jnp.bfloat16).astype(jnp.float32))
    out_bf = bottleneck_forward(kb, sb, nb, params_bf)
    out_bf = jax.block_until_ready(out_bf)
    ref_bf = _reference(kb, sb, nb, params_bf)
    assert out_bf.dtype == jnp.bfloat16
    assert jnp.allclose(out_bf.astype(jnp.float32), ref_bf, atol=3e-2, rtol=3e-2), \
        "bf16 mismatch vs reference"

    print("KERNEL_OK")
</pallas_src>

<mosaic_0001>
module attributes {stable_mosaic.version = 11 : i64} {
  func.func @kernel(%arg0: i32, %arg1: memref<8x128xf32, #tpu.memory_space<vmem>>, %arg2: memref<8x128xf32, #tpu.memory_space<vmem>>, %arg3: memref<8x128xf32, #tpu.memory_space<vmem>>, %arg4: memref<256x128xf32, #tpu.memory_space<vmem>>, %arg5: memref<1x128xf32, #tpu.memory_space<vmem>>, %arg6: memref<8x128xf32, #tpu.memory_space<vmem>>, %arg7: memref<1x1x128xf32, #tpu.memory_space<vmem>>, %arg8: memref<1x1x128xf32, #tpu.memory_space<vmem>>, %arg9: memref<8x256xf32, #tpu.memory_space<vmem>>) attributes {dimension_semantics = [#tpu.dimension_semantics<parallel>], iteration_bounds = array<i64: 2>, scalar_prefetch = 0 : i64, scratch_operands = 1 : i64, tpu.core_type = #tpu.core_type<tc>, window_params = [{transform_indices = @transform_0, window_bounds = array<i64: 8, 128>}, {transform_indices = @transform_1, window_bounds = array<i64: 8, 128>}, {transform_indices = @transform_2, window_bounds = array<i64: 8, 128>}, {pipeline_mode = #tpu.pipeline_mode<synchronous>, transform_indices = @transform_3, window_bounds = array<i64: 256, 128>}, {pipeline_mode = #tpu.pipeline_mode<synchronous>, transform_indices = @transform_4, window_bounds = array<i64: 1, 128>}, {transform_indices = @transform_5, window_bounds = array<i64: 8, 128>}, {transform_indices = @transform_6, window_bounds = array<i64: 1, 1, 128>}, {transform_indices = @transform_7, window_bounds = array<i64: 1, 1, 128>}]} {
    %c0 = arith.constant 0 : index
    %c0_0 = arith.constant 0 : index
    %0 = vector.load %arg1[%c0, %c0_0] : memref<8x128xf32, #tpu.memory_space<vmem>>, vector<8x128xf32>
    %c0_1 = arith.constant 0 : index
    %c0_2 = arith.constant 0 : index
    %1 = vector.load %arg2[%c0_1, %c0_2] : memref<8x128xf32, #tpu.memory_space<vmem>>, vector<8x128xf32>
    %c0_3 = arith.constant 0 : index
    %c0_4 = arith.constant 0 : index
    %2 = vector.load %arg3[%c0_3, %c0_4] : memref<8x128xf32, #tpu.memory_space<vmem>>, vector<8x128xf32>
    %3 = arith.cmpf one, %2, %2 : vector<8x128xf32>
    %4 = arith.select %3, %1, %2 : vector<8x128xi1>, vector<8x128xf32>
    %c0_5 = arith.constant 0 : index
    %c0_6 = arith.constant 0 : index
    %5 = vector.load %arg9[%c0_5, %c0_6] : memref<8x256xf32, #tpu.memory_space<vmem>>, vector<8x128xf32>
    tpu.vector_store %arg9[%c0_5, %c0_6], %0 {strides = array<i32>} : memref<8x256xf32, #tpu.memory_space<vmem>>, vector<8x128xf32>,
    %c0_7 = arith.constant 0 : index
    %c128 = arith.constant 128 : index
    %6 = vector.load %arg9[%c0_7, %c128] : memref<8x256xf32, #tpu.memory_space<vmem>>, vector<8x128xf32>
    tpu.vector_store %arg9[%c0_7, %c128], %4 {strides = array<i32>} : memref<8x256xf32, #tpu.memory_space<vmem>>, vector<8x128xf32>,
    %c0_8 = arith.constant 0 : index
    %c0_9 = arith.constant 0 : index
    %7 = vector.load %arg9[%c0_8, %c0_9] : memref<8x256xf32, #tpu.memory_space<vmem>>, vector<8x256xf32>
    %c0_10 = arith.constant 0 : index
    %c0_11 = arith.constant 0 : index
    %8 = vector.load %arg4[%c0_10, %c0_11] : memref<256x128xf32, #tpu.memory_space<vmem>>, vector<256x128xf32>
    %cst = arith.constant dense<0.000000e+00> : vector<8x128xf32>
    %9 = tpu.matmul %7, %8, %cst {dimension_numbers = #tpu.dot_dimension_numbers<[1], [0], [0], [1], [0, 0, 1, 1], [], []>} : vector<8x256xf32>, vector<256x128xf32>, vector<8x128xf32> -> vector<8x128xf32>
    %c0_12 = arith.constant 0 : index
    %c0_13 = arith.constant 0 : index
    %10 = vector.load %arg5[%c0_12, %c0_13] : memref<1x128xf32, #tpu.memory_space<vmem>>, vector<1x128xf32>
    %11 = vector.broadcast %10 : vector<1x128xf32> to vector<8x128xf32>
    %12 = arith.addf %9, %11 : vector<8x128xf32>
    %c0_14 = arith.constant 0 : index
    %c0_15 = arith.constant 0 : index
    %13 = vector.load %arg6[%c0_14, %c0_15] : memref<8x128xf32, #tpu.memory_space<vmem>>, vector<8x128xf32>
    tpu.vector_store %arg6[%c0_14, %c0_15], %12 {strides = array<i32>} : memref<8x128xf32, #tpu.memory_space<vmem>>, vector<8x128xf32>,
    %c8_i32 = arith.constant 8 : i32
    %14 = arith.muli %arg0, %c8_i32 : i32
    %15 = tpu.iota {dimensions = array<i32: 0>} : vector<8x1xi32>
    %16 = vector.broadcast %14 : i32 to vector<8x1xi32>
    %17 = arith.addi %16, %15 : vector<8x1xi32>
    %c13_i32 = arith.constant 13 : i32
    %18 = vector.broadcast %c13_i32 : i32 to vector<8x1xi32>
    %19 = arith.cmpi slt, %17, %18 : vector<8x1xi32>
    %cst_16 = arith.constant 0.000000e+00 : f32
    %20 = vector.shape_cast %19 : vector<8x1xi1> to vector<8x1xi1>
    %21 = vector.broadcast %20 : vector<8x1xi1> to vector<8x128xi1>
    %22 = vector.broadcast %cst_16 : f32 to vector<8x128xf32>
    %23 = arith.select %21, %12, %22 : vector<8x128xi1>, vector<8x128xf32>
    %cst_17 = arith.constant dense<0.000000e+00> : vector<128xf32>
    %24 = vector.multi_reduction <add>, %23, %cst_17 [0] : vector<8x128xf32> to vector<128xf32>
    %25 = vector.shape_cast %24 : vector<128xf32> to vector<1x128xf32>
    %26 = vector.shape_cast %25 : vector<1x128xf32> to vector<1x1x128xf32>
    %c0_18 = arith.constant 0 : index
    %c0_19 = arith.constant 0 : index
    %c0_20 = arith.constant 0 : index
    %27 = vector.load %arg7[%c0_18, %c0_19, %c0_20] : memref<1x1x128xf32, #tpu.memory_space<vmem>>, vector<1x1x128xf32>
    tpu.vector_store %arg7[%c0_18, %c0_19, %c0_20], %26 {strides = array<i32>} : memref<1x1x128xf32, #tpu.memory_space<vmem>>, vector<1x1x128xf32>,
    %28 = arith.mulf %23, %23 : vector<8x128xf32>
    %cst_21 = arith.constant dense<0.000000e+00> : vector<128xf32>
    %29 = vector.multi_reduction <add>, %28, %cst_21 [0] : vector<8x128xf32> to vector<128xf32>
    %30 = vector.shape_cast %29 : vector<128xf32> to vector<1x128xf32>
    %31 = vector.shape_cast %30 : vector<1x128xf32> to vector<1x1x128xf32>
    %c0_22 = arith.constant 0 : index
    %c0_23 = arith.constant 0 : index
    %c0_24 = arith.constant 0 : index
    %32 = vector.load %arg8[%c0_22, %c0_23, %c0_24] : memref<1x1x128xf32, #tpu.memory_space<vmem>>, vector<1x1x128xf32>
    tpu.vector_store %arg8[%c0_22, %c0_23, %c0_24], %31 {strides = array<i32>} : memref<1x1x128xf32, #tpu.memory_space<vmem>>, vector<1x1x128xf32>,
    return
  }
  func.func @transform_0(%arg0: i32) -> (i32, i32) {
    %c0_i32 = arith.constant 0 : i32
    %c0_i32_0 = arith.constant 0 : i32
    return %arg0, %c0_i32 : i32, i32
  }
  func.func @transform_1(%arg0: i32) -> (i32, i32) {
    %c0_i32 = arith.constant 0 : i32
    %c0_i32_0 = arith.constant 0 : i32
    return %arg0, %c0_i32 : i32, i32
  }
  func.func @transform_2(%arg0: i32) -> (i32, i32) {
    %c0_i32 = arith.constant 0 : i32
    %c0_i32_0 = arith.constant 0 : i32
    return %arg0, %c0_i32 : i32, i32
  }
  func.func @transform_3(%arg0: i32) -> (i32, i32) {
    %c0_i32 = arith.constant 0 : i32
    %c0_i32_0 = arith.constant 0 : i32
    %c0_i32_1 = arith.constant 0 : i32
    return %c0_i32, %c0_i32_0 : i32, i32
  }
  func.func @transform_4(%arg0: i32) -> (i32, i32) {
    %c0_i32 = arith.constant 0 : i32
    %c0_i32_0 = arith.constant 0 : i32
    %c0_i32_1 = arith.constant 0 : i32
    return %c0_i32, %c0_i32_0 : i32, i32
  }
  func.func @transform_5(%arg0: i32) -> (i32, i32) {
    %c0_i32 = arith.constant 0 : i32
    %c0_i32_0 = arith.constant 0 : i32
    return %arg0, %c0_i32 : i32, i32
  }
  func.func @transform_6(%arg0: i32) -> (i32, i32, i32) {
    %c0_i32 = arith.constant 0 : i32
    %c0_i32_0 = arith.constant 0 : i32
    %c0_i32_1 = arith.constant 0 : i32
    return %arg0, %c0_i32, %c0_i32_0 : i32, i32, i32
  }
  func.func @transform_7(%arg0: i32) -> (i32, i32, i32) {
    %c0_i32 = arith.constant 0 : i32
    %c0_i32_0 = arith.constant 0 : i32
    %c0_i32_1 = arith.constant 0 : i32
    return %arg0, %c0_i32, %c0_i32_0 : i32, i32, i32
  }
}

module attributes {stable_mosaic.version = 11 : i64} {
  func.func @_norm_act_kernel(%arg0: i32, %arg1: memref<8x128xf32, #tpu.memory_space<vmem>>, %arg2: memref<1x128xf32, #tpu.memory_space<vmem>>, %arg3: memref<1x128xf32, #tpu.memory_space<vmem>>, %arg4: memref<1x128xf32, #tpu.memory_space<vmem>>, %arg5: memref<8x128xf32, #tpu.memory_space<vmem>>) attributes {dimension_semantics = [#tpu.dimension_semantics<parallel>], iteration_bounds = array<i64: 2>, scalar_prefetch = 0 : i64, scratch_operands = 0 : i64, tpu.core_type = #tpu.core_type<tc>, window_params = [{transform_indices = @transform_0, window_bounds = array<i64: 8, 128>}, {pipeline_mode = #tpu.pipeline_mode<synchronous>, transform_indices = @transform_1, window_bounds = array<i64: 1, 128>}, {pipeline_mode = #tpu.pipeline_mode<synchronous>, transform_indices = @transform_2, window_bounds = array<i64: 1, 128>}, {pipeline_mode = #tpu.pipeline_mode<synchronous>, transform_indices = @transform_3, window_bounds = array<i64: 1, 128>}, {transform_indices = @transform_4, window_bounds = array<i64: 8, 128>}]} {
    %c0 = arith.constant 0 : index
    %c0_0 = arith.constant 0 : index
    %0 = vector.load %arg1[%c0, %c0_0] : memref<8x128xf32, #tpu.memory_space<vmem>>, vector<8x128xf32>
    %c0_1 = arith.constant 0 : index
    %c0_2 = arith.constant 0 : index
    %1 = vector.load %arg2[%c0_1, %c0_2] : memref<1x128xf32, #tpu.memory_space<vmem>>, vector<1x128xf32>
    %2 = vector.broadcast %1 : vector<1x128xf32> to vector<8x128xf32>
    %3 = arith.mulf %0, %2 : vector<8x128xf32>
    %c0_3 = arith.constant 0 : index
    %c0_4 = arith.constant 0 : index
    %4 = vector.load %arg3[%c0_3, %c0_4] : memref<1x128xf32, #tpu.memory_space<vmem>>, vector<1x128xf32>
    %5 = vector.broadcast %4 : vector<1x128xf32> to vector<8x128xf32>
    %6 = arith.addf %3, %5 : vector<8x128xf32>
    %cst = arith.constant 0.000000e+00 : f32
    %7 = vector.broadcast %cst : f32 to vector<8x128xf32>
    %8 = arith.cmpf oge, %6, %7 : vector<8x128xf32>
    %c0_5 = arith.constant 0 : index
    %c0_6 = arith.constant 0 : index
    %9 = vector.load %arg4[%c0_5, %c0_6] : memref<1x128xf32, #tpu.memory_space<vmem>>, vector<1x128xf32>
    %10 = vector.broadcast %9 : vector<1x128xf32> to vector<8x128xf32>
    %11 = arith.mulf %10, %6 : vector<8x128xf32>
    %12 = arith.select %8, %6, %11 : vector<8x128xi1>, vector<8x128xf32>
    %c0_7 = arith.constant 0 : index
    %c0_8 = arith.constant 0 : index
    %13 = vector.load %arg5[%c0_7, %c0_8] : memref<8x128xf32, #tpu.memory_space<vmem>>, vector<8x128xf32>
    tpu.vector_store %arg5[%c0_7, %c0_8], %12 {strides = array<i32>} : memref<8x128xf32, #tpu.memory_space<vmem>>, vector<8x128xf32>,
    return
  }
  func.func @transform_0(%arg0: i32) -> (i32, i32) {
    %c0_i32 = arith.constant 0 : i32
    %c0_i32_0 = arith.constant 0 : i32
    return %arg0, %c0_i32 : i32, i32
  }
  func.func @transform_1(%arg0: i32) -> (i32, i32) {
    %c0_i32 = arith.constant 0 : i32
    %c0_i32_0 = arith.constant 0 : i32
    %c0_i32_1 = arith.constant 0 : i32
    return %c0_i32, %c0_i32_0 : i32, i32
  }
  func.func @transform_2(%arg0: i32) -> (i32, i32) {
    %c0_i32 = arith.constant 0 : i32
    %c0_i32_0 = arith.constant 0 : i32
    %c0_i32_1 = arith.constant 0 : i32
    return %c0_i32, %c0_i32_0 : i32, i32
  }
  func.func @transform_3(%arg0: i32) -> (i32, i32) {
    %c0_i32 = arith.constant 0 : i32
    %c0_i32_0 = arith.constant 0 : i32
    %c0_i32_1 = arith.constant 0 : i32
    return %c0_i32, %c0_i32_0 : i32, i32
  }
  func.func @transform_4(%arg0: i32) -> (i32, i32) {
    %c0_i32 = arith.constant 0 : i32
    %c0_i32_0 = arith.constant 0 : i32
    return %arg0, %c0_i32 : i32, i32
  }
}

</mosaic_0001>

<llo_original>
// kernel: bottleneck_forward.3
$region0: #{bottleneck_forward.3}
  #allocation0 [shape = 'u32[]', space=smem, size = 0x4, offset = 0x4, fixed_abs, tag = 'smem constant byte address 0x4 - core index']
  #allocation1 [shape = 'u32[144,128]{1,0:T(1,128)}', space=vmem, size = 0x12000, scoped, tag = 'internal scratch']
  %s0 = inlined_call_operand.vmem [shape: f32[16,128], index: 0, kind: input, shape index: {}]
  %s1 = inlined_call_operand.vmem [shape: f32[1,128], index: 1, kind: input, shape index: {}]
  %s2 = inlined_call_operand.vmem [shape: f32[1,128], index: 2, kind: input, shape index: {}]
  %s3 = inlined_call_operand.vmem [shape: f32[1,128], index: 3, kind: input, shape index: {}]
  %s4 = inlined_call_operand.hbm [shape: f32[16,128], index: 4, kind: output, shape index: {}]
  %s5 = sld [smem:[#allocation0]]
  $region49: #{bottleneck_forward.3} parent=0
    _
  %s7 = ssub.s32 1, %s5
  %s8 = scalar_select 0, %s7, %s5
  $region1: #{bottleneck_forward.3} parent=0
    #allocation2 [shape = 'u8[8192]{0}', space=vmem, size = 0x2000, scoped, tag = 'output window, operand 0']
    #allocation3 [shape = 's32[2]{0}', space=sflag, size = 0x8, scoped, tag = 'scoped memory for bottleneck_forward.3']
    %9 = vsyncpa [#allocation3], 0
    %s10 = scalar_lea.sflag [#allocation3], 1
    %11 = vsyncpa %s10, 0
    loop: start=0, step=1, limit=4
    $region2: #{bottleneck_forward.3} parent=1 // loop_pre_header
      _
    $region3: #{bottleneck_forward.3} parent=1 // loop_header
      %s13 = sphi 0, %s17
      %p14 = scmp.ge.s32.totalorder %s13, 4
      %s23 = sphi 0, %s25
      %s26 = sphi 0, %s23
      %s27 = sphi 0, %s26
      %s43 = sphi 0, %s27
      %s47 = sphi 0, %s47
      %s49 = sphi 0, %s47
      %s50 = sphi 0, %s49
      %s64 = sphi 0, %s50
      %s68 = sphi 0, %s68
      %s70 = sphi 0, %s68
      %s71 = sphi 0, %s70
      %s85 = sphi 0, %s71
      %s89 = sphi 0, %s89
      %s91 = sphi 0, %s89
      %s92 = sphi 0, %s91
      %s106 = sphi 0, %s92
      %s112 = sphi 0, %s114
      %s115 = sphi 0, %s112
      %s116 = sphi 0, %s115
      %s132 = sphi 0, %s116
    $region4: #{bottleneck_forward.3} parent=1 // loop_header_branch
      %16 = sbr.rel (%p14) target = $region8
    $region5: #{bottleneck_forward.3} parent=1 // loop_body
      %s18 = ssub.s32 %s13, 1
      %s19 = ssub.s32 %s13, 2
      %s20 = sadd.s32 %s13, 1
      %s21 = ssub.s32 %s13, %s20
      %p22 = scmp.eq.s32.totalorder %s21, 0
      %s24 = sadd.s32 %s23, 1
      %s25 = scalar_select %p22, %s23, %s24
      %p28 = pneg %p22
      %p29 = scmp.eq.s32.totalorder %s13, 1
      %p30 = por %p28, %p29
      %p31 = scmp.ne.s32.totalorder %s23, %s26
      %p32 = scmp.eq.s32.totalorder %s13, 0
      %p33 = por %p31, %p32
      %p34 = scmp.ne.s32.totalorder %s23, %s26
      %p35 = scmp.eq.s32.totalorder %s18, 1
      %p36 = por %p34, %p35
      %p37 = scmp.ne.s32.totalorder %s26, %s27
      %p38 = scmp.eq.s32.totalorder %s18, 0
      %p39 = por %p37, %p38
      %p40 = scmp.ne.s32.totalorder %s26, %s27
      %p41 = scmp.eq.s32.totalorder %s19, 1
      %p42 = por %p40, %p41
      %p44 = scmp.ne.s32.totalorder %s27, %s43
      %p45 = scmp.eq.s32.totalorder %s19, 0
      %p46 = por %p44, %p45
      %s48 = sadd.s32 %s47, 1
      %p51 = scmp.eq.s32.totalorder %s13, 1
      %p52 = scmp.ne.s32.totalorder %s47, %s49
      %p53 = scmp.eq.s32.totalorder %s13, 0
      %p54 = por %p52, %p53
      %p55 = scmp.ne.s32.totalorder %s47, %s49
      %p56 = scmp.eq.s32.totalorder %s18, 1
      %p57 = por %p55, %p56
      %p58 = scmp.ne.s32.totalorder %s49, %s50
      %p59 = scmp.eq.s32.totalorder %s18, 0
      %p60 = por %p58, %p59
      %p61 = scmp.ne.s32.totalorder %s49, %s50
      %p62 = scmp.eq.s32.totalorder %s19, 1
      %p63 = por %p61, %p62
      %p65 = scmp.ne.s32.totalorder %s50, %s64
      %p66 = scmp.eq.s32.totalorder %s19, 0
      %p67 = por %p65, %p66
      %s69 = sadd.s32 %s68, 1
      %p72 = scmp.eq.s32.totalorder %s13, 1
      %p73 = scmp.ne.s32.totalorder %s68, %s70
      %p74 = scmp.eq.s32.totalorder %s13, 0
      %p75 = por %p73, %p74
      %p76 = scmp.ne.s32.totalorder %s68, %s70
      %p77 = scmp.eq.s32.totalorder %s18, 1
      %p78 = por %p76, %p77
      %p79 = scmp.ne.s32.totalorder %s70, %s71
      %p80 = scmp.eq.s32.totalorder %s18, 0
      %p81 = por %p79, %p80
      %p82 = scmp.ne.s32.totalorder %s70, %s71
      %p83 = scmp.eq.s32.totalorder %s19, 1
      %p84 = por %p82, %p83
      %p86 = scmp.ne.s32.totalorder %s71, %s85
      %p87 = scmp.eq.s32.totalorder %s19, 0
      %p88 = por %p86, %p87
      %s90 = sadd.s32 %s89, 1
      %p93 = scmp.eq.s32.totalorder %s13, 1
      %p94 = scmp.ne.s32.totalorder %s89, %s91
      %p95 = scmp.eq.s32.totalorder %s13, 0
      %p96 = por %p94, %p95
      %p97 = scmp.ne.s32.totalorder %s89, %s91
      %p98 = scmp.eq.s32.totalorder %s18, 1
      %p99 = por %p97, %p98
      %p100 = scmp.ne.s32.totalorder %s91, %s92
      %p101 = scmp.eq.s32.totalorder %s18, 0
      %p102 = por %p100, %p101
      %p103 = scmp.ne.s32.totalorder %s91, %s92
      %p104 = scmp.eq.s32.totalorder %s19, 1
      %p105 = por %p103, %p104
      %p107 = scmp.ne.s32.totalorder %s92, %s106
      %p108 = scmp.eq.s32.totalorder %s19, 0
      %p109 = por %p107, %p108
      %s110 = ssub.s32 %s13, %s20
      %p111 = scmp.eq.s32.totalorder %s110, 0
      %s113 = sadd.s32 %s112, 1
      %s114 = scalar_select %p111, %s112, %s113
      %p117 = pneg %p111
      %p118 = scmp.eq.s32.totalorder %s13, 1
      %p119 = por %p117, %p118
      %p120 = scmp.ne.s32.totalorder %s112, %s115
      %p121 = scmp.eq.s32.totalorder %s13, 0
      %p122 = por %p120, %p121
      %p123 = scmp.ne.s32.totalorder %s112, %s115
      %p124 = scmp.eq.s32.totalorder %s18, 1
      %p125 = por %p123, %p124
      %p126 = scmp.ne.s32.totalorder %s115, %s116
      %p127 = scmp.eq.s32.totalorder %s18, 0
      %p128 = por %p126, %p127
      %p129 = scmp.ne.s32.totalorder %s115, %s116
      %p130 = scmp.eq.s32.totalorder %s19, 1
      %p131 = por %p129, %p130
      %p133 = scmp.ne.s32.totalorder %s116, %s132
      %p134 = scmp.eq.s32.totalorder %s19, 0
      %p135 = por %p133, %p134
      %p136 = scmp.le.s32.totalorder 1, %s13
      %p137 = scmp.lt.s32.totalorder %s13, 3
      %p138 = pnand %p136, %p137
      %p139 = pneg %p138
      // Predicated region
      $region9: #{bottleneck_forward.3} parent=5 // pred_check
        _
      $region10: #{bottleneck_forward.3} parent=5 // pred_check_branch
        %141 = sbr.rel (%p138) target = $region12
      $region11: #{bottleneck_forward.3} parent=5 // pred_region
        %s142 = ssub.s32 %s13, 1
        // Predicated region
        $region13: #{bottleneck_forward.3} parent=11 // pred_check
          %p143 = pneg %p60
        $region14: #{bottleneck_forward.3} parent=11 // pred_check_branch
          %145 = sbr.rel (%p143) target = $region16
        $region15: #{bottleneck_forward.3} parent=11 // pred_region
          _
        $region16: #{bottleneck_forward.3} parent=11 // pred_fallthru
          _
        // Predicated region
        $region17: #{bottleneck_forward.3} parent=11 // pred_check
          %p146 = pneg %p81
        $region18: #{bottleneck_forward.3} parent=11 // pred_check_branch
          %148 = sbr.rel (%p146) target = $region20
        $region19: #{bottleneck_forward.3} parent=11 // pred_region
          _
        $region20: #{bottleneck_forward.3} parent=11 // pred_fallthru
          _
        // Predicated region
        $region21: #{bottleneck_forward.3} parent=11 // pred_check
          %p149 = pneg %p102
        $region22: #{bottleneck_forward.3} parent=11 // pred_check_branch
          %151 = sbr.rel (%p149) target = $region24
        $region23: #{bottleneck_forward.3} parent=11 // pred_region
          _
        $region24: #{bottleneck_forward.3} parent=11 // pred_fallthru
          _
      $region12: #{bottleneck_forward.3} parent=5 // pred_fallthru
        _
      %p152 = scmp.lt.s32.totalorder %s13, 2
      // Predicated region
      $region25: #{bottleneck_forward.3} parent=5 // pred_check
        %p153 = pneg %p152
      $region26: #{bottleneck_forward.3} parent=5 // pred_check_branch
        %155 = sbr.rel (%p153) target = $region28
      $region27: #{bottleneck_forward.3} parent=5 // pred_region
        // Predicated region
        $region29: #{bottleneck_forward.3} parent=27 // pred_check
          %p156 = pneg %p33
        $region30: #{bottleneck_forward.3} parent=27 // pred_check_branch
          %158 = sbr.rel (%p156) target = $region32
        $region31: #{bottleneck_forward.3} parent=27 // pred_region
          %p159 = scmp.lt.s32.totalorder %s13, 1
          %s160 = scalar_select %p159, %s13, 1
          %s161 = smul.addr %s160, 8
          %s162 = scalar_lea.vmem %s0, %s161
        $region32: #{bottleneck_forward.3} parent=27 // pred_fallthru
          _
      $region28: #{bottleneck_forward.3} parent=5 // pred_fallthru
        _
      %p163 = scmp.le.s32.totalorder 1, %s13
      %p164 = scmp.lt.s32.totalorder %s13, 3
      %p165 = pnand %p163, %p164
      %p166 = pneg %p165
      // Predicated region
      $region33: #{bottleneck_forward.3} parent=5 // pred_check
        _
      $region34: #{bottleneck_forward.3} parent=5 // pred_check_branch
        %168 = sbr.rel (%p165) target = $region36
      $region35: #{bottleneck_forward.3} parent=5 // pred_region
        %s169 = ssub.s32 %s13, 1
        %p170 = scmp.lt.s32.totalorder %s18, 1
        %s171 = scalar_select %p170, %s18, 1
        %s172 = smul.addr %s171, 8
        %s173 = scalar_lea.vmem %s0, %s172
        %p174 = pneg %p39
        %p175 = pneg %p36
        %p176 = pneg %p60
        %p177 = pneg %p57
        %p178 = pneg %p81
        %p179 = pneg %p78
        %p180 = pneg %p102
        %p181 = pneg %p99
        %p182 = pneg %p128
        %p183 = pneg %p125
        %s184 = sand.u32 %s115, 1
        %s185 = scalar_lea.sflag [#allocation3], %s184
        %s186 = sand.u32 %s115, 1
        %s187 = smul.addr %s186, 8
        %s188 = scalar_lea.vmem [#allocation2], %s187
        %p189 = scmp.lt.s32.totalorder %s18, 1
        %s190 = scalar_select %p189, %s18, 1
        %s191 = smul.addr %s190, 8
        %s192 = scalar_lea.vmem %s0, %s191
        %v193 = vld [vmem:[%s192] sm:$0xff]
        %v194 = vld [vmem:[%s1] sm:$0x1]
        %v196 = vlaneseq
        %v197 = vshrl.u32 %v196, 7
        %v198 = vsub.s32 0, %v197
        %v199 = vrot.slane %v194, %v198
        %v201 = vmul.f32 %v193, %v199
        %v202 = vld [vmem:[%s2] sm:$0x1]
        %v204 = vlaneseq
        %v205 = vshrl.u32 %v204, 7
        %v206 = vsub.s32 0, %v205
        %v207 = vrot.slane %v202, %v206
        %v209 = vadd.f32 %v201, %v207
        %vm210 = vcmp.ge.f32.partialorder %v209, 0.0
        %v211 = vld [vmem:[%s3] sm:$0x1]
        %v213 = vlaneseq
        %v214 = vshrl.u32 %v213, 7
        %v215 = vsub.s32 0, %v214
        %v216 = vrot.slane %v211, %v215
        %v218 = vmul.f32 %v216, %v209
        %v219 = vsel %vm210, %v209, %v218
        %220 = vst [vmem:[%s188] sm:$0xff] %v219
        %s221 = sand.u32 %s115, 1
        %s222 = scalar_lea.sflag [#allocation3], %s221
        %s223 = sand.u32 %s115, 1
        %s224 = smul.addr %s223, 8
        %s225 = scalar_lea.vmem [#allocation2], %s224
        // Predicated region
        $region37: #{bottleneck_forward.3} parent=35 // pred_check
          %p226 = pneg %p125
        $region38: #{bottleneck_forward.3} parent=35 // pred_check_branch
          %228 = sbr.rel (%p226) target = $region40
        $region39: #{bottleneck_forward.3} parent=35 // pred_region
          %s230 = ssub.s32 128, 128
          %231 = vsyncadd %s222, %s230
          %s232 = smul.addr %s18, 128
          %s233 = scalar_lea.hbm %s4, %s232
          %s235 = sshll.u32 %s225, 4
          %s236 = int_to_ptr.vmem [resolvable:$true] %s235
          %238 = dma.vmem_to_hbm [thread:$0]  %s236, 128, %s233, %s222
        $region40: #{bottleneck_forward.3} parent=35 // pred_fallthru
          _
      $region36: #{bottleneck_forward.3} parent=5 // pred_fallthru
        _
      %p239 = scmp.le.s32.totalorder 2, %s13
      // Predicated region
      $region41: #{bottleneck_forward.3} parent=5 // pred_check
        %p240 = pneg %p239
      $region42: #{bottleneck_forward.3} parent=5 // pred_check_branch
        %242 = sbr.rel (%p240) target = $region44
      $region43: #{bottleneck_forward.3} parent=5 // pred_region
        %s243 = ssub.s32 %s13, 2
        // Predicated region
        $region45: #{bottleneck_forward.3} parent=43 // pred_check
          %p244 = pneg %p131
        $region46: #{bottleneck_forward.3} parent=43 // pred_check_branch
          %246 = sbr.rel (%p244) target = $region48
        $region47: #{bottleneck_forward.3} parent=43 // pred_region
          %s247 = sand.u32 %s116, 1
          %s248 = scalar_lea.sflag [#allocation3], %s247
          %s249 = sand.u32 %s116, 1
          %s250 = smul.addr %s249, 8
          %s251 = scalar_lea.vmem [#allocation2], %s250
          %252 = dma.done %s248, 128
        $region48: #{bottleneck_forward.3} parent=43 // pred_fallthru
          _
      $region44: #{bottleneck_forward.3} parent=5 // pred_fallthru
        _
    $region6: #{bottleneck_forward.3} parent=1 // loop_footer
      %s17 = sadd.s32 1, %s13
    $region7: #{bottleneck_forward.3} parent=1 // loop_footer_branch
      %12 = sbr.rel target = $region3
    $region8: #{bottleneck_forward.3} parent=1 // loop_exit
      _
    %253 = vsyncpa [#allocation3], 1
    %s254 = scalar_lea.sflag [#allocation3], 1
    %255 = vsyncpa %s254, 1

// kernel: bottleneck_forward.2
$region0: #{bottleneck_forward.2}
  #allocation0 [shape = 'u32[]', space=smem, size = 0x4, offset = 0x4, fixed_abs, tag = 'smem constant byte address 0x4 - core index']
  #allocation1 [shape = 'u32[144,128]{1,0:T(1,128)}', space=vmem, size = 0x12000, scoped, tag = 'internal scratch']
  #allocation2 [shape = 'f32[8,256]{1,0:T(8,128)}', space=vmem, size = 0x2000, scoped, tag = 'scratch operand']
  %s0 = inlined_call_operand.vmem [shape: f32[16,128], index: 0, kind: input, shape index: {}]
  %s1 = inlined_call_operand.vmem [shape: f32[16,128], index: 1, kind: input, shape index: {}]
  %s2 = inlined_call_operand.vmem [shape: f32[16,128], index: 2, kind: input, shape index: {}]
  %s3 = inlined_call_operand.vmem [shape: f32[256,128], index: 3, kind: input, shape index: {}]
  %s4 = inlined_call_operand.vmem [shape: f32[1,128], index: 4, kind: input, shape index: {}]
  %s5 = inlined_call_operand.vmem [shape: f32[16,128], index: 5, kind: output, shape index: {0}]
  %s6 = inlined_call_operand.vmem [shape: f32[2,1,128], index: 6, kind: output, shape index: {1}]
  %s7 = inlined_call_operand.vmem [shape: f32[2,1,128], index: 7, kind: output, shape index: {2}]
  %8 = xla_tuple %s5, %s6, %s7
  %s9 = sld [smem:[#allocation0]]
  $region69: #{bottleneck_forward.2} parent=0
    _
  %s11 = ssub.s32 1, %s9
  %s12 = scalar_select 0, %s11, %s9
  loop: start=0, step=1, limit=4
  $region2: #{bottleneck_forward.2} parent=0 // loop_pre_header
    _
  $region3: #{bottleneck_forward.2} parent=0 // loop_header
    %s14 = sphi 0, %s18
    %p15 = scmp.ge.s32.totalorder %s14, 4
    %s24 = sphi 0, %s26
    %s27 = sphi 0, %s24
    %s28 = sphi 0, %s27
    %s44 = sphi 0, %s28
    %s50 = sphi 0, %s52
    %s53 = sphi 0, %s50
    %s54 = sphi 0, %s53
    %s70 = sphi 0, %s54
    %s76 = sphi 0, %s78
    %s79 = sphi 0, %s76
    %s80 = sphi 0, %s79
    %s96 = sphi 0, %s80
    %s100 = sphi 0, %s100
    %s102 = sphi 0, %s100
    %s103 = sphi 0, %s102
    %s117 = sphi 0, %s103
    %s121 = sphi 0, %s121
    %s123 = sphi 0, %s121
    %s124 = sphi 0, %s123
    %s138 = sphi 0, %s124
    %s144 = sphi 0, %s146
    %s147 = sphi 0, %s144
    %s148 = sphi 0, %s147
    %s164 = sphi 0, %s148
    %s170 = sphi 0, %s172
    %s173 = sphi 0, %s170
    %s174 = sphi 0, %s173
    %s190 = sphi 0, %s174
    %s196 = sphi 0, %s198
    %s199 = sphi 0, %s196
    %s200 = sphi 0, %s199
    %s216 = sphi 0, %s200
  $region4: #{bottleneck_forward.2} parent=0 // loop_header_branch
    %17 = sbr.rel (%p15) target = $region8
  $region5: #{bottleneck_forward.2} parent=0 // loop_body
    %s19 = ssub.s32 %s14, 1
    %s20 = ssub.s32 %s14, 2
    %s21 = sadd.s32 %s14, 1
    %s22 = ssub.s32 %s14, %s21
    %p23 = scmp.eq.s32.totalorder %s22, 0
    %s25 = sadd.s32 %s24, 1
    %s26 = scalar_select %p23, %s24, %s25
    %p29 = pneg %p23
    %p30 = scmp.eq.s32.totalorder %s14, 1
    %p31 = por %p29, %p30
    %p32 = scmp.ne.s32.totalorder %s24, %s27
    %p33 = scmp.eq.s32.totalorder %s14, 0
    %p34 = por %p32, %p33
    %p35 = scmp.ne.s32.totalorder %s24, %s27
    %p36 = scmp.eq.s32.totalorder %s19, 1
    %p37 = por %p35, %p36
    %p38 = scmp.ne.s32.totalorder %s27, %s28
    %p39 = scmp.eq.s32.totalorder %s19, 0
    %p40 = por %p38, %p39
    %p41 = scmp.ne.s32.totalorder %s27, %s28
    %p42 = scmp.eq.s32.totalorder %s20, 1
    %p43 = por %p41, %p42
    %p45 = scmp.ne.s32.totalorder %s28, %s44
    %p46 = scmp.eq.s32.totalorder %s20, 0
    %p47 = por %p45, %p46
    %s48 = ssub.s32 %s14, %s21
    %p49 = scmp.eq.s32.totalorder %s48, 0
    %s51 = sadd.s32 %s50, 1
    %s52 = scalar_select %p49, %s50, %s51
    %p55 = pneg %p49
    %p56 = scmp.eq.s32.totalorder %s14, 1
    %p57 = por %p55, %p56
    %p58 = scmp.ne.s32.totalorder %s50, %s53
    %p59 = scmp.eq.s32.totalorder %s14, 0
    %p60 = por %p58, %p59
    %p61 = scmp.ne.s32.totalorder %s50, %s53
    %p62 = scmp.eq.s32.totalorder %s19, 1
    %p63 = por %p61, %p62
    %p64 = scmp.ne.s32.totalorder %s53, %s54
    %p65 = scmp.eq.s32.totalorder %s19, 0
    %p66 = por %p64, %p65
    %p67 = scmp.ne.s32.totalorder %s53, %s54
    %p68 = scmp.eq.s32.totalorder %s20, 1
    %p69 = por %p67, %p68
    %p71 = scmp.ne.s32.totalorder %s54, %s70
    %p72 = scmp.eq.s32.totalorder %s20, 0
    %p73 = por %p71, %p72
    %s74 = ssub.s32 %s14, %s21
    %p75 = scmp.eq.s32.totalorder %s74, 0
    %s77 = sadd.s32 %s76, 1
    %s78 = scalar_select %p75, %s76, %s77
    %p81 = pneg %p75
    %p82 = scmp.eq.s32.totalorder %s14, 1
    %p83 = por %p81, %p82
    %p84 = scmp.ne.s32.totalorder %s76, %s79
    %p85 = scmp.eq.s32.totalorder %s14, 0
    %p86 = por %p84, %p85
    %p87 = scmp.ne.s32.totalorder %s76, %s79
    %p88 = scmp.eq.s32.totalorder %s19, 1
    %p89 = por %p87, %p88
    %p90 = scmp.ne.s32.totalorder %s79, %s80
    %p91 = scmp.eq.s32.totalorder %s19, 0
    %p92 = por %p90, %p91
    %p93 = scmp.ne.s32.totalorder %s79, %s80
    %p94 = scmp.eq.s32.totalorder %s20, 1
    %p95 = por %p93, %p94
    %p97 = scmp.ne.s32.totalorder %s80, %s96
    %p98 = scmp.eq.s32.totalorder %s20, 0
    %p99 = por %p97, %p98
    %s101 = sadd.s32 %s100, 1
    %p104 = scmp.eq.s32.totalorder %s14, 1
    %p105 = scmp.ne.s32.totalorder %s100, %s102
    %p106 = scmp.eq.s32.totalorder %s14, 0
    %p107 = por %p105, %p106
    %p108 = scmp.ne.s32.totalorder %s100, %s102
    %p109 = scmp.eq.s32.totalorder %s19, 1
    %p110 = por %p108, %p109
    %p111 = scmp.ne.s32.totalorder %s102, %s103
    %p112 = scmp.eq.s32.totalorder %s19, 0
    %p113 = por %p111, %p112
    %p114 = scmp.ne.s32.totalorder %s102, %s103
    %p115 = scmp.eq.s32.totalorder %s20, 1
    %p116 = por %p114, %p115
    %p118 = scmp.ne.s32.totalorder %s103, %s117
    %p119 = scmp.eq.s32.totalorder %s20, 0
    %p120 = por %p118, %p119
    %s122 = sadd.s32 %s121, 1
    %p125 = scmp.eq.s32.totalorder %s14, 1
    %p126 = scmp.ne.s32.totalorder %s121, %s123
    %p127 = scmp.eq.s32.totalorder %s14, 0
    %p128 = por %p126, %p127
    %p129 = scmp.ne.s32.totalorder %s121, %s123
    %p130 = scmp.eq.s32.totalorder %s19, 1
    %p131 = por %p129, %p130
    %p132 = scmp.ne.s32.totalorder %s123, %s124
    %p133 = scmp.eq.s32.totalorder %s19, 0
    %p134 = por %p132, %p133
    %p135 = scmp.ne.s32.totalorder %s123, %s124
    %p136 = scmp.eq.s32.totalorder %s20, 1
    %p137 = por %p135, %p136
    %p139 = scmp.ne.s32.totalorder %s124, %s138
    %p140 = scmp.eq.s32.totalorder %s20, 0
    %p141 = por %p139, %p140
    %s142 = ssub.s32 %s14, %s21
    %p143 = scmp.eq.s32.totalorder %s142, 0
    %s145 = sadd.s32 %s144, 1
    %s146 = scalar_select %p143, %s144, %s145
    %p149 = pneg %p143
    %p150 = scmp.eq.s32.totalorder %s14, 1
    %p151 = por %p149, %p150
    %p152 = scmp.ne.s32.totalorder %s144, %s147
    %p153 = scmp.eq.s32.totalorder %s14, 0
    %p154 = por %p152, %p153
    %p155 = scmp.ne.s32.totalorder %s144, %s147
    %p156 = scmp.eq.s32.totalorder %s19, 1
    %p157 = por %p155, %p156
    %p158 = scmp.ne.s32.totalorder %s147, %s148
    %p159 = scmp.eq.s32.totalorder %s19, 0
    %p160 = por %p158, %p159
    %p161 = scmp.ne.s32.totalorder %s147, %s148
    %p162 = scmp.eq.s32.totalorder %s20, 1
    %p163 = por %p161, %p162
    %p165 = scmp.ne.s32.totalorder %s148, %s164
    %p166 = scmp.eq.s32.totalorder %s20, 0
    %p167 = por %p165, %p166
    %s168 = ssub.s32 %s14, %s21
    %p169 = scmp.eq.s32.totalorder %s168, 0
    %s171 = sadd.s32 %s170, 1
    %s172 = scalar_select %p169, %s170, %s171
    %p175 = pneg %p169
    %p176 = scmp.eq.s32.totalorder %s14, 1
    %p177 = por %p175, %p176
    %p178 = scmp.ne.s32.totalorder %s170, %s173
    %p179 = scmp.eq.s32.totalorder %s14, 0
    %p180 = por %p178, %p179
    %p181 = scmp.ne.s32.totalorder %s170, %s173
    %p182 = scmp.eq.s32.totalorder %s19, 1
    %p183 = por %p181, %p182
    %p184 = scmp.ne.s32.totalorder %s173, %s174
    %p185 = scmp.eq.s32.totalorder %s19, 0
    %p186 = por %p184, %p185
    %p187 = scmp.ne.s32.totalorder %s173, %s174
    %p188 = scmp.eq.s32.totalorder %s20, 1
    %p189 = por %p187, %p188
    %p191 = scmp.ne.s32.totalorder %s174, %s190
    %p192 = scmp.eq.s32.totalorder %s20, 0
    %p193 = por %p191, %p192
    %s194 = ssub.s32 %s14, %s21
    %p195 = scmp.eq.s32.totalorder %s194, 0
    %s197 = sadd.s32 %s196, 1
    %s198 = scalar_select %p195, %s196, %s197
    %p201 = pneg %p195
    %p202 = scmp.eq.s32.totalorder %s14, 1
    %p203 = por %p201, %p202
    %p204 = scmp.ne.s32.totalorder %s196, %s199
    %p205 = scmp.eq.s32.totalorder %s14, 0
    %p206 = por %p204, %p205
    %p207 = scmp.ne.s32.totalorder %s196, %s199
    %p208 = scmp.eq.s32.totalorder %s19, 1
    %p209 = por %p207, %p208
    %p210 = scmp.ne.s32.totalorder %s199, %s200
    %p211 = scmp.eq.s32.totalorder %s19, 0
    %p212 = por %p210, %p211
    %p213 = scmp.ne.s32.totalorder %s199, %s200
    %p214 = scmp.eq.s32.totalorder %s20, 1
    %p215 = por %p213, %p214
    %p217 = scmp.ne.s32.totalorder %s200, %s216
    %p218 = scmp.eq.s32.totalorder %s20, 0
    %p219 = por %p217, %p218
    %p220 = scmp.le.s32.totalorder 1, %s14
    %p221 = scmp.lt.s32.totalorder %s14, 3
    %p222 = pnand %p220, %p221
    %p223 = pneg %p222
    // Predicated region
    $region9: #{bottleneck_forward.2} parent=5 // pred_check
      _
    $region10: #{bottleneck_forward.2} parent=5 // pred_check_branch
      %225 = sbr.rel (%p222) target = $region12
    $region11: #{bottleneck_forward.2} parent=5 // pred_region
      %s226 = ssub.s32 %s14, 1
      // Predicated region
      $region13: #{bottleneck_forward.2} parent=11 // pred_check
        %p227 = pneg %p113
      $region14: #{bottleneck_forward.2} parent=11 // pred_check_branch
        %229 = sbr.rel (%p227) target = $region16
      $region15: #{bottleneck_forward.2} parent=11 // pred_region
        _
      $region16: #{bottleneck_forward.2} parent=11 // pred_fallthru
        _
      // Predicated region
      $region17: #{bottleneck_forward.2} parent=11 // pred_check
        %p230 = pneg %p134
      $region18: #{bottleneck_forward.2} parent=11 // pred_check_branch
        %232 = sbr.rel (%p230) target = $region20
      $region19: #{bottleneck_forward.2} parent=11 // pred_region
        _
      $region20: #{bottleneck_forward.2} parent=11 // pred_fallthru
        _
    $region12: #{bottleneck_forward.2} parent=5 // pred_fallthru
      _
    %p233 = scmp.lt.s32.totalorder %s14, 2
    // Predicated region
    $region21: #{bottleneck_forward.2} parent=5 // pred_check
      %p234 = pneg %p233
    $region22: #{bottleneck_forward.2} parent=5 // pred_check_branch
      %236 = sbr.rel (%p234) target = $region24
    $region23: #{bottleneck_forward.2} parent=5 // pred_region
      // Predicated region
      $region25: #{bottleneck_forward.2} parent=23 // pred_check
        %p237 = pneg %p34
      $region26: #{bottleneck_forward.2} parent=23 // pred_check_branch
        %239 = sbr.rel (%p237) target = $region28
      $region27: #{bottleneck_forward.2} parent=23 // pred_region
        %p240 = scmp.lt.s32.totalorder %s14, 1
        %s241 = scalar_select %p240, %s14, 1
        %s242 = smul.addr %s241, 8
        %s243 = scalar_lea.vmem %s0, %s242
      $region28: #{bottleneck_forward.2} parent=23 // pred_fallthru
        _
      // Predicated region
      $region29: #{bottleneck_forward.2} parent=23 // pred_check
        %p244 = pneg %p60
      $region30: #{bottleneck_forward.2} parent=23 // pred_check_branch
        %246 = sbr.rel (%p244) target = $region32
      $region31: #{bottleneck_forward.2} parent=23 // pred_region
        %p247 = scmp.lt.s32.totalorder %s14, 1
        %s248 = scalar_select %p247, %s14, 1
        %s249 = smul.addr %s248, 8
        %s250 = scalar_lea.vmem %s1, %s249
      $region32: #{bottleneck_forward.2} parent=23 // pred_fallthru
        _
      // Predicated region
      $region33: #{bottleneck_forward.2} parent=23 // pred_check
        %p251 = pneg %p86
      $region34: #{bottleneck_forward.2} parent=23 // pred_check_branch
        %253 = sbr.rel (%p251) target = $region36
      $region35: #{bottleneck_forward.2} parent=23 // pred_region
        %p254 = scmp.lt.s32.totalorder %s14, 1
        %s255 = scalar_select %p254, %s14, 1
        %s256 = smul.addr %s255, 8
        %s257 = scalar_lea.vmem %s2, %s256
      $region36: #{bottleneck_forward.2} parent=23 // pred_fallthru
        _
    $region24: #{bottleneck_forward.2} parent=5 // pred_fallthru
      _
    %p258 = scmp.le.s32.totalorder 1, %s14
    %p259 = scmp.lt.s32.totalorder %s14, 3
    %p260 = pnand %p258, %p259
    %p261 = pneg %p260
    // Predicated region
    $region37: #{bottleneck_forward.2} parent=5 // pred_check
      _
    $region38: #{bottleneck_forward.2} parent=5 // pred_check_branch
      %263 = sbr.rel (%p260) target = $region40
    $region39: #{bottleneck_forward.2} parent=5 // pred_region
      %s264 = ssub.s32 %s14, 1
      %p265 = scmp.lt.s32.totalorder %s19, 1
      %s266 = scalar_select %p265, %s19, 1
      %s267 = smul.addr %s266, 8
      %s268 = scalar_lea.vmem %s0, %s267
      %p269 = pneg %p40
      %p270 = pneg %p37
      %p271 = scmp.lt.s32.totalorder %s19, 1
      %s272 = scalar_select %p271, %s19, 1
      %s273 = smul.addr %s272, 8
      %s274 = scalar_lea.vmem %s1, %s273
      %p275 = pneg %p66
      %p276 = pneg %p63
      %p277 = scmp.lt.s32.totalorder %s19, 1
      %s278 = scalar_select %p277, %s19, 1
      %s279 = smul.addr %s278, 8
      %s280 = scalar_lea.vmem %s2, %s279
      %p281 = pneg %p92
      %p282 = pneg %p89
      %p283 = pneg %p113
      %p284 = pneg %p110
      %p285 = pneg %p134
      %p286 = pneg %p131
      %p287 = pneg %p160
      %p288 = pneg %p157
      %p289 = scmp.lt.s32.totalorder %s19, 1
      %s290 = scalar_select %p289, %s19, 1
      %s291 = smul.addr %s290, 8
      %s292 = scalar_lea.vmem %s5, %s291
      %p293 = pneg %p186
      %p294 = pneg %p183
      %p295 = scmp.lt.s32.totalorder %s19, 1
      %s296 = scalar_select %p295, %s19, 1
      %s297 = scalar_lea.vmem %s6, %s296
      %p298 = pneg %p212
      %p299 = pneg %p209
      %p300 = scmp.lt.s32.totalorder %s19, 1
      %s301 = scalar_select %p300, %s19, 1
      %s302 = scalar_lea.vmem %s7, %s301
      %p303 = scmp.lt.s32.totalorder %s19, 1
      %s304 = scalar_select %p303, %s19, 1
      %s305 = smul.addr %s304, 8
      %s306 = scalar_lea.vmem %s0, %s305
      %p307 = scmp.lt.s32.totalorder %s19, 1
      %s308 = scalar_select %p307, %s19, 1
      %s309 = smul.addr %s308, 8
      %s310 = scalar_lea.vmem %s1, %s309
      %p311 = scmp.lt.s32.totalorder %s19, 1
      %s312 = scalar_select %p311, %s19, 1
      %s313 = smul.addr %s312, 8
      %s314 = scalar_lea.vmem %s2, %s313
      %p315 = scmp.lt.s32.totalorder %s19, 1
      %s316 = scalar_select %p315, %s19, 1
      %s317 = smul.addr %s316, 8
      %s318 = scalar_lea.vmem %s5, %s317
      %p319 = scmp.lt.s32.totalorder %s19, 1
      %s320 = scalar_select %p319, %s19, 1
      %s321 = scalar_lea.vmem %s6, %s320
      %p322 = scmp.lt.s32.totalorder %s19, 1
      %s323 = scalar_select %p322, %s19, 1
      %s324 = scalar_lea.vmem %s7, %s323
      %v325 = vld [vmem:[%s306] sm:$0xff]
      %v326 = vld [vmem:[%s310] sm:$0xff]
      %v327 = vld [vmem:[%s314] sm:$0xff]
      %vm328 = vcmp.ne.f32.partialorder %v327, %v327
      %v329 = vsel %vm328, %v326, %v327
      %330 = vst [vmem:[#allocation2] sm:$0xff] %v325
      %331 = vst [vmem:[#allocation2 + $0x8] sm:$0xff] %v329
      %v332 = vld [vmem:[#allocation2] sm:$0xff]
      %v333 = vld [vmem:[#allocation2 + $0x8] sm:$0xff]
      %v334 = vld [vmem:[%s3] sm:$0xff]
      %v335 = vld [vmem:[%s3 + $0x8] sm:$0xff]
      %v336 = vld [vmem:[%s3 + $0x10] sm:$0xff]
      %v337 = vld [vmem:[%s3 + $0x18] sm:$0xff]
      %v338 = vld [vmem:[%s3 + $0x20] sm:$0xff]
      %v339 = vld [vmem:[%s3 + $0x28] sm:$0xff]
      %v340 = vld [vmem:[%s3 + $0x30] sm:$0xff]
      %v341 = vld [vmem:[%s3 + $0x38] sm:$0xff]
      %v342 = vld [vmem:[%s3 + $0x40] sm:$0xff]
      %v343 = vld [vmem:[%s3 + $0x48] sm:$0xff]
      %v344 = vld [vmem:[%s3 + $0x50] sm:$0xff]
      %v345 = vld [vmem:[%s3 + $0x58] sm:$0xff]
      %v346 = vld [vmem:[%s3 + $0x60] sm:$0xff]
      %v347 = vld [vmem:[%s3 + $0x68] sm:$0xff]
      %v348 = vld [vmem:[%s3 + $0x70] sm:$0xff]
      %v349 = vld [vmem:[%s3 + $0x78] sm:$0xff]
      %v350 = vld [vmem:[%s3 + $0x80] sm:$0xff]
      %v351 = vld [vmem:[%s3 + $0x88] sm:$0xff]
      %v352 = vld [vmem:[%s3 + $0x90] sm:$0xff]
      %v353 = vld [vmem:[%s3 + $0x98] sm:$0xff]
      %v354 = vld [vmem:[%s3 + $0xa0] sm:$0xff]
      %v355 = vld [vmem:[%s3 + $0xa8] sm:$0xff]
      %v356 = vld [vmem:[%s3 + $0xb0] sm:$0xff]
      %v357 = vld [vmem:[%s3 + $0xb8] sm:$0xff]
      %v358 = vld [vmem:[%s3 + $0xc0] sm:$0xff]
      %v359 = vld [vmem:[%s3 + $0xc8] sm:$0xff]
      %v360 = vld [vmem:[%s3 + $0xd0] sm:$0xff]
      %v361 = vld [vmem:[%s3 + $0xd8] sm:$0xff]
      %v362 = vld [vmem:[%s3 + $0xe0] sm:$0xff]
      %v363 = vld [vmem:[%s3 + $0xe8] sm:$0xff]
      %v364 = vld [vmem:[%s3 + $0xf0] sm:$0xff]
      %v365 = vld [vmem:[%s3 + $0xf8] sm:$0xff]
      %v366 = vld [vmem:[%s4] sm:$0x1]
      %v368 = vlaneseq
      %v369 = vshrl.u32 %v368, 7
      %v370 = vsub.s32 0, %v369
      %v371 = vrot.slane %v366, %v370
      %373 = vmatprep.subr.mxu0 0.0
      %374 = vmatpush1.msra.mxu0 %v349
      %375 = vmatprep.subr.mxu0 0.0
      %376 = vmatpush1.msra.mxu0 %v348
      %377 = vmatprep.subr.mxu0 0.0
      %378 = vmatpush1.msra.mxu0 %v347
      %379 = vmatprep.subr.mxu0 0.0
      %380 = vmatpush1.msra.mxu0 %v346
      %381 = vmatprep.subr.mxu0 0.0
      %382 = vmatpush1.msra.mxu0 %v345
      %383 = vmatprep.subr.mxu0 0.0
      %384 = vmatpush1.msra.mxu0 %v344
      %385 = vmatprep.subr.mxu0 0.0
      %386 = vmatpush1.msra.mxu0 %v343
      %387 = vmatprep.subr.mxu0 0.0
      %388 = vmatpush1.msra.mxu0 %v342
      %389 = vmatprep.subr.mxu0 0.0
      %390 = vmatpush1.msra.mxu0 %v341
      %391 = vmatprep.subr.mxu0 0.0
      %392 = vmatpush1.msra.mxu0 %v340
      %393 = vmatprep.subr.mxu0 0.0
      %394 = vmatpush1.msra.mxu0 %v339
      %395 = vmatprep.subr.mxu0 0.0
      %396 = vmatpush1.msra.mxu0 %v338
      %397 = vmatprep.subr.mxu0 0.0
      %398 = vmatpush1.msra.mxu0 %v337
      %399 = vmatprep.subr.mxu0 0.0
      %400 = vmatpush1.msra.mxu0 %v336
      %401 = vmatprep.subr.mxu0 0.0
      %402 = vmatpush1.msra.mxu0 %v335
      %403 = vmatprep.subr.mxu0 0.0
      %404 = vmatpush1.msra.mxu0 %v334
      %405 = vmatprep.subr.mxu0 0.0
      %406 = vmatpush2.msra.mxu0 %v365
      %407 = vmatprep.subr.mxu0 0.0
      %408 = vmatpush2.msra.mxu0 %v364
      %409 = vmatprep.subr.mxu0 0.0
      %410 = vmatpush2.msra.mxu0 %v363
      %411 = vmatprep.subr.mxu0 0.0
      %412 = vmatpush2.msra.mxu0 %v362
      %413 = vmatprep.subr.mxu0 0.0
      %414 = vmatpush2.msra.mxu0 %v361
      %415 = vmatprep.subr.mxu0 0.0
      %416 = vmatpush2.msra.mxu0 %v360
      %417 = vmatprep.subr.mxu0 0.0
      %418 = vmatpush2.msra.mxu0 %v359
      %419 = vmatprep.subr.mxu0 0.0
      %420 = vmatpush2.msra.mxu0 %v358
      %421 = vmatprep.subr.mxu0 0.0
      %422 = vmatpush2.msra.mxu0 %v357
      %423 = vmatprep.subr.mxu0 0.0
      %424 = vmatpush2.msra.mxu0 %v356
      %425 = vmatprep.subr.mxu0 0.0
      %426 = vmatpush2.msra.mxu0 %v355
      %427 = vmatprep.subr.mxu0 0.0
      %428 = vmatpush2.msra.mxu0 %v354
      %429 = vmatprep.subr.mxu0 0.0
      %430 = vmatpush2.msra.mxu0 %v353
      %431 = vmatprep.subr.mxu0 0.0
      %432 = vmatpush2.msra.mxu0 %v352
      %433 = vmatprep.subr.mxu0 0.0
      %434 = vmatpush2.msra.mxu0 %v351
      %435 = vmatprep.subr.mxu0 0.0
      %436 = vmatpush2.msra.mxu0 %v350
      %437 = vmatprep.mubr.f32.mxu0 %v333
      %438 = vmatmul.mubr.f32.gmra.mxu0 %v332
      %v439 = vpop.f32.mrf.mxu0
      %v440 = vadd.f32 %v371, %v439
      %v441 = vpop.f32.mrf.mxu0
      %442 = vdwg.mxu0
      %443 = vst [vmem:[%s318] sm:$0xff] %v440
      %s444 = smul.u32 %s19, 8
      %v445 = vlaneseq
      %v446 = vshrl.u32 %v445, 7
      %v447 = vstv %s444
      %v448 = vadd.s32 %v447, %v446
      %vm449 = vcmp.lt.s32.totalorder %v448, 13
      %v450 = vsel %vm449, 1, 0
      %vm451 = vcmp.eq.s32.totalorder %v450, 1
      %v452 = vsel %vm451, %v440, 0.0
      %v453 = vrot.slane %v452, 4
      %v454 = vadd.f32 %v452, %v453
      %v455 = vrot.slane %v454, 2
      %v456 = vadd.f32 %v454, %v455
      %v457 = vrot.slane %v456, 1
      %v458 = vadd.f32 %v456, %v457
      %459 = vst [vmem:[%s321] sm:$0x1] %v458
      %v460 = vmul.f32 %v452, %v452
      %v461 = vrot.slane %v460, 4
      %v462 = vadd.f32 %v460, %v461
      %v463 = vrot.slane %v462, 2
      %v464 = vadd.f32 %v462, %v463
      %v465 = vrot.slane %v464, 1
      %v466 = vadd.f32 %v464, %v465
      %467 = vst [vmem:[%s324] sm:$0x1] %v466
      %p468 = scmp.lt.s32.totalorder %s19, 1
      %s469 = scalar_select %p468, %s19, 1
      %s470 = smul.addr %s469, 8
      %s471 = scalar_lea.vmem %s5, %s470
      %p472 = scmp.lt.s32.totalorder %s19, 1
      %s473 = scalar_select %p472, %s19, 1
      %s474 = scalar_lea.vmem %s6, %s473
      %p475 = scmp.lt.s32.totalorder %s19, 1
      %s476 = scalar_select %p475, %s19, 1
      %s477 = scalar_lea.vmem %s7, %s476
      // Predicated region
      $region41: #{bottleneck_forward.2} parent=39 // pred_check
        %p478 = pneg %p157
      $region42: #{bottleneck_forward.2} parent=39 // pred_check_branch
        %480 = sbr.rel (%p478) target = $region44
      $region43: #{bottleneck_forward.2} parent=39 // pred_region
        _
      $region44: #{bottleneck_forward.2} parent=39 // pred_fallthru
        _
      // Predicated region
      $region45: #{bottleneck_forward.2} parent=39 // pred_check
        %p481 = pneg %p183
      $region46: #{bottleneck_forward.2} parent=39 // pred_check_branch
        %483 = sbr.rel (%p481) target = $region48
      $region47: #{bottleneck_forward.2} parent=39 // pred_region
        _
      $region48: #{bottleneck_forward.2} parent=39 // pred_fallthru
        _
      // Predicated region
      $region49: #{bottleneck_forward.2} parent=39 // pred_check
        %p484 = pneg %p209
      $region50: #{bottleneck_forward.2} parent=39 // pred_check_branch
        %486 = sbr.rel (%p484) target = $region52
      $region51: #{bottleneck_forward.2} parent=39 // pred_region
        _
      $region52: #{bottleneck_forward.2} parent=39 // pred_fallthru
        _
    $region40: #{bottleneck_forward.2} parent=5 // pred_fallthru
      _
    %p487 = scmp.le.s32.totalorder 2, %s14
    // Predicated region
    $region53: #{bottleneck_forward.2} parent=5 // pred_check
      %p488 = pneg %p487
    $region54: #{bottleneck_forward.2} parent=5 // pred_check_branch
      %490 = sbr.rel (%p488) target = $region56
    $region55: #{bottleneck_forward.2} parent=5 // pred_region
      %s491 = ssub.s32 %s14, 2
      // Predicated region
      $region57: #{bottleneck_forward.2} parent=55 // pred_check
        %p492 = pneg %p163
      $region58: #{bottleneck_forward.2} parent=55 // pred_check_branch
        %494 = sbr.rel (%p492) target = $region60
      $region59: #{bottleneck_forward.2} parent=55 // pred_region
        %p495 = scmp.lt.s32.totalorder %s20, 1
        %s496 = scalar_select %p495, %s20, 1
        %s497 = smul.addr %s496, 8
        %s498 = scalar_lea.vmem %s5, %s497
      $region60: #{bottleneck_forward.2} parent=55 // pred_fallthru
        _
      // Predicated region
      $region61: #{bottleneck_forward.2} parent=55 // pred_check
        %p499 = pneg %p189
      $region62: #{bottleneck_forward.2} parent=55 // pred_check_branch
        %501 = sbr.rel (%p499) target = $region64
      $region63: #{bottleneck_forward.2} parent=55 // pred_region
        %p502 = scmp.lt.s32.totalorder %s20, 1
        %s503 = scalar_select %p502, %s20, 1
        %s504 = scalar_lea.vmem %s6, %s503
      $region64: #{bottleneck_forward.2} parent=55 // pred_fallthru
        _
      // Predicated region
      $region65: #{bottleneck_forward.2} parent=55 // pred_check
        %p505 = pneg %p215
      $region66: #{bottleneck_forward.2} parent=55 // pred_check_branch
        %507 = sbr.rel (%p505) target = $region68
      $region67: #{bottleneck_forward.2} parent=55 // pred_region
        %p508 = scmp.lt.s32.totalorder %s20, 1
        %s509 = scalar_select %p508, %s20, 1
        %s510 = scalar_lea.vmem %s7, %s509
      $region68: #{bottleneck_forward.2} parent=55 // pred_fallthru
        _
    $region56: #{bottleneck_forward.2} parent=5 // pred_fallthru
      _
  $region6: #{bottleneck_forward.2} parent=0 // loop_footer
    %s18 = sadd.s32 1, %s14
  $region7: #{bottleneck_forward.2} parent=0 // loop_footer_branch
    %13 = sbr.rel target = $region3
  $region8: #{bottleneck_forward.2} parent=0 // loop_exit
    _

</llo_original>
